<compile_context>
chip_gen: v5e
topology: v5e:2x2
jax: 0.10.0
libtpu: 0.0.40
codegen_flags: <defaults>
</compile_context>

<pallas_src>
import functools

import numpy as np
import jax
import jax.numpy as jnp
from jax import lax
from jax.experimental import pallas as pl
from jax.experimental.pallas import tpu as pltpu  # noqa: F401  (imported per template)

SIGMA = 0.5        # noise std (stands in for config.SIGMA)
HEAD_PAD = 128     # lane-dense padded width of the fused value+advantage head
HIDDEN = 256       # fc1 output width (matches the PyTorch module)


def _round_up(x, m):
    return (x + m - 1) // m * m


# --------------------------------------------------------------------------- #
# Pallas kernel: fc1 (noise pre-folded) + ReLU + single fused head matmul
#                + dueling combination.  Everything stays in VMEM.
# --------------------------------------------------------------------------- #
def dqn_mlp_kernel(inv_action_dim,
                   x_ref, w1_ref, b1_ref, w_head_ref, b_head_ref,
                   adv_mask_ref, val_mask_ref, q_ref):
    # fc1: noisy weight/bias already folded at reset time -> one bf16 matmul.
    xb = x_ref[...].astype(jnp.bfloat16)
    h = jnp.dot(xb, w1_ref[...], preferred_element_type=jnp.float32) + b1_ref[...]
    h = jnp.maximum(h, 0.0)                # ReLU; dropout is identity (eval)

    # Fused value+advantage head: ONE matmul against the packed (H, 128) slab.
    #   cols [0, A) -> advantage, col A -> value, remaining cols zero-padded.
    head = (jnp.dot(h.astype(jnp.bfloat16), w_head_ref[...],
                    preferred_element_type=jnp.float32) + b_head_ref[...])

    # Dueling combination: q = value + advantage - mean(advantage)
    value = jnp.sum(head * val_mask_ref[...], axis=-1, keepdims=True)
    adv_mean = (jnp.sum(head * adv_mask_ref[...], axis=-1, keepdims=True)
                * inv_action_dim)
    # Lane-dense (B_pad, 128) write; caller slices [:, :action_dim].
    q_ref[...] = (value + head - adv_mean).astype(q_ref.dtype)


# --------------------------------------------------------------------------- #
# Parameter construction (mirrors the PyTorch module's init)
# --------------------------------------------------------------------------- #
def init_noisy_linear(key, in_features, out_features, sigma=SIGMA):
    """NoisyLinear params, stored pre-transposed (In, Out) for the kernel."""
    bound = float(np.sqrt(6.0 / (in_features + out_features)))   # xavier_uniform_
    wmu_t = jax.random.uniform(key, (in_features, out_features), jnp.float32,
                               minval=-bound, maxval=bound)
    wsig_t = jnp.full((in_features, out_features),
                      sigma / np.sqrt(in_features), jnp.float32)
    bmu = jnp.zeros((out_features,), jnp.float32)
    bsig = jnp.full((out_features,), sigma / np.sqrt(in_features), jnp.float32)
    return dict(wmu_t=wmu_t, wsig_t=wsig_t, bmu=bmu, bsig=bsig)


def init_dqn(key, state_dim, action_dim, num_conv_layers=3, sigma=SIGMA):
    assert 0 < action_dim < HEAD_PAD, "head packing requires action_dim < 128"
    keys = jax.random.split(key, num_conv_layers + 3)
    in_ch = state_dim[0]
    channels = [16, 32, 64][:num_conv_layers]
    h, w = state_dim[1], state_dim[2]
    conv = []
    for i, out_ch in enumerate(channels):
        stride = 2 if i == num_conv_layers - 1 else 1
        std = float(np.sqrt(2.0 / (in_ch * 9)))
        conv.append(dict(
            w=jax.random.normal(keys[i], (out_ch, in_ch, 3, 3), jnp.float32) * std,
            b=jnp.zeros((out_ch,), jnp.float32),
            gamma=jnp.ones((out_ch,), jnp.float32),
            beta=jnp.zeros((out_ch,), jnp.float32),
            mean=jnp.zeros((out_ch,), jnp.float32),
            var=jnp.ones((out_ch,), jnp.float32),
            stride=stride))
        h = (h + 2 - 3) // stride + 1
        w = (w + 2 - 3) // stride + 1
        in_ch = out_ch
    conv_out = in_ch * h * w
    fc1 = init_noisy_linear(keys[-3], conv_out, HIDDEN, sigma)
    fcv = init_noisy_linear(keys[-2], HIDDEN, 1, sigma)
    fca = init_noisy_linear(keys[-1], HIDDEN, action_dim, sigma)
    col = jnp.arange(HEAD_PAD)
    adv_mask = (col < action_dim).astype(jnp.float32)[None, :]
    val_mask = (col == action_dim).astype(jnp.float32)[None, :]
    return dict(conv=conv, fc1=fc1, value=fcv, advantage=fca,
                adv_mask=adv_mask, val_mask=val_mask,
                conv_out=conv_out, action_dim=action_dim)


def factorized_eps(key, in_features, out_features):
    """Factorized noise, identical to NoisyLinear.reset_noise()."""
    k_in, k_out = jax.random.split(key)
    e_in = jax.random.normal(k_in, (in_features,), jnp.float32) / np.sqrt(in_features)
    e_out = jax.random.normal(k_out, (out_features,), jnp.float32) / np.sqrt(out_features)
    f = lambda e: jnp.sign(e) * jnp.sqrt(jnp.abs(e))
    return f(e_in), f(e_out)


def fold_noise(params, key):
    """reset_noise(): draw factorized noise and fold it into kernel-ready
    effective weights (bf16) and biases (f32).  Runs once per noise reset so
    the hot forward does no noise algebra and streams half the bytes.
    Returns (kernel_inputs, raw_eps)."""
    A = params["action_dim"]
    fc1, fcv, fca = params["fc1"], params["value"], params["advantage"]
    K, H = fc1["wmu_t"].shape
    k1, kv, ka = jax.random.split(key, 3)
    eps = {"fc1": factorized_eps(k1, K, H),
           "value": factorized_eps(kv, H, 1),
           "advantage": factorized_eps(ka, H, A)}

    def noisy_w(p, e_in, e_out):
        return p["wmu_t"] + p["wsig_t"] * (e_in[:, None] * e_out[None, :])

    def noisy_b(p, e_out):
        return p["bmu"] + p["bsig"] * e_out

    w1 = noisy_w(fc1, *eps["fc1"])                              # (K, H) one-time
    b1 = noisy_b(fc1, eps["fc1"][1]).reshape(1, H)

    w_head = jnp.zeros((H, HEAD_PAD), jnp.float32)
    w_head = w_head.at[:, :A].set(noisy_w(fca, *eps["advantage"]))
    w_head = w_head.at[:, A:A + 1].set(noisy_w(fcv, *eps["value"]))
    b_head = jnp.zeros((1, HEAD_PAD), jnp.float32)
    b_head = b_head.at[0, :A].set(noisy_b(fca, eps["advantage"][1]))
    b_head = b_head.at[0, A].set(noisy_b(fcv, eps["value"][1])[0])

    noisy = dict(w1=w1.astype(jnp.bfloat16), b1=b1,
                 w_head=w_head.astype(jnp.bfloat16), b_head=b_head)
    return noisy, eps


# --------------------------------------------------------------------------- #
# Conv + BN + ReLU front-end (plain JAX / XLA) and the fused Pallas MLP call
# --------------------------------------------------------------------------- #
def conv_frontend(x, conv_params, bn_eps=1e-5):
    for p in conv_params:
        s = p["stride"]
        x = lax.conv_general_dilated(
            x, p["w"], window_strides=(s, s), padding=((1, 1), (1, 1)),
            dimension_numbers=("NCHW", "OIHW", "NCHW"))
        x = x + p["b"][None, :, None, None]
        x = ((x - p["mean"][None, :, None, None])
             / jnp.sqrt(p["var"][None, :, None, None] + bn_eps)
             * p["gamma"][None, :, None, None] + p["beta"][None, :, None, None])
        x = jnp.maximum(x, 0.0)
    return x.reshape(x.shape[0], -1)


def dqn_forward(params, noisy, x):
    """Eval-mode DQN forward -> Q-values (B, action_dim).
    All noise packing / metrics are off this hot path (see fold_noise /
    noise_sigma_metrics)."""
    A = params["action_dim"]
    feats = conv_frontend(x, params["conv"])                     # (B, K)
    B, _ = feats.shape
    Bp = _round_up(max(B, 1), 8)                                 # sublane align
    if Bp != B:
        feats = jnp.pad(feats, ((0, Bp - B), (0, 0)))

    # No grid / no BlockSpecs: single invocation, whole operands in VMEM,
    # no redundant double-buffering of the weight slabs.
    q_pad = pl.pallas_call(
        functools.partial(dqn_mlp_kernel, 1.0 / float(A)),
        out_shape=jax.ShapeDtypeStruct((Bp, HEAD_PAD), jnp.float32),
    )(feats, noisy["w1"], noisy["b1"], noisy["w_head"], noisy["b_head"],
      params["adv_mask"], params["val_mask"])

    return q_pad[:B, :A]


def noise_sigma_metrics(params):
    """sigma-mean diagnostics.  Depend only on the (static) sigma parameters,
    so they are computed OUTSIDE the hot forward (e.g. at param-update time)."""
    fc1, fcv, fca = params["fc1"], params["value"], params["advantage"]
    return {
        "fc1_weight_sigma_mean": jnp.mean(jnp.abs(fc1["wsig_t"])),
        "fc1_bias_sigma_mean": jnp.mean(jnp.abs(fc1["bsig"])),
        "value_weight_sigma_mean": jnp.mean(jnp.abs(fcv["wsig_t"])),
        "value_bias_sigma_mean": jnp.mean(jnp.abs(fcv["bsig"])),
        "advantage_weight_sigma_mean": jnp.mean(jnp.abs(fca["wsig_t"])),
        "advantage_bias_sigma_mean": jnp.mean(jnp.abs(fca["bsig"])),
    }


# --------------------------------------------------------------------------- #
# Pure-JAX reference (mirrors the PyTorch forward exactly, eval mode)
# --------------------------------------------------------------------------- #
def _noisy_linear_ref(x, p, eps_in, eps_out):
    w_t = p["wmu_t"] + p["wsig_t"] * (eps_in[:, None] * eps_out[None, :])
    bias = p["bmu"] + p["bsig"] * eps_out
    return jnp.dot(x, w_t, precision=lax.Precision.HIGHEST) + bias


def dqn_forward_ref(params, eps, x):
    feats = conv_frontend(x, params["conv"])
    h = jnp.maximum(_noisy_linear_ref(feats, params["fc1"], *eps["fc1"]), 0.0)
    value = _noisy_linear_ref(h, params["value"], *eps["value"])
    adv = _noisy_linear_ref(h, params["advantage"], *eps["advantage"])
    return value + (adv - adv.mean(axis=1, keepdims=True))


if __name__ == "__main__":
    STATE_DIM = (4, 8, 8)    # (channels, H, W) -> conv_out = 64 * 4 * 4 = 1024
    ACTION_DIM = 6
    BATCH = 4

    root = jax.random.PRNGKey(0)
    k_param, k_noise, k_x = jax.random.split(root, 3)

    params = init_dqn(k_param, STATE_DIM, ACTION_DIM)
    noisy, eps = fold_noise(params, k_noise)                 # reset_noise()
    x = jax.random.normal(k_x, (BATCH,) + STATE_DIM, jnp.float32)

    q = jax.block_until_ready(dqn_forward(params, noisy, x))
    q_ref = dqn_forward_ref(params, eps, x)

    assert q.shape == (BATCH, ACTION_DIM)
    np.testing.assert_allclose(np.asarray(q), np.asarray(q_ref),
                               rtol=2e-2, atol=2e-2)

    # Metrics are constants of the sigma parameters: sigma / sqrt(in_features).
    metrics = jax.block_until_ready(noise_sigma_metrics(params))
    np.testing.assert_allclose(float(metrics["fc1_weight_sigma_mean"]),
                               SIGMA / np.sqrt(params["conv_out"]), rtol=1e-5)
    np.testing.assert_allclose(float(metrics["fc1_bias_sigma_mean"]),
                               SIGMA / np.sqrt(params["conv_out"]), rtol=1e-5)
    np.testing.assert_allclose(float(metrics["value_weight_sigma_mean"]),
                               SIGMA / np.sqrt(HIDDEN), rtol=1e-5)
    np.testing.assert_allclose(float(metrics["value_bias_sigma_mean"]),
                               SIGMA / np.sqrt(HIDDEN), rtol=1e-5)
    np.testing.assert_allclose(float(metrics["advantage_weight_sigma_mean"]),
                               SIGMA / np.sqrt(HIDDEN), rtol=1e-5)
    np.testing.assert_allclose(float(metrics["advantage_bias_sigma_mean"]),
                               SIGMA / np.sqrt(HIDDEN), rtol=1e-5)

    print("KERNEL_OK")
</pallas_src>

<mosaic_0001>
module attributes {stable_mosaic.version = 11 : i64} {
  func.func @dqn_mlp_kernel(%arg0: memref<8x1024xf32, #tpu.memory_space<vmem>>, %arg1: memref<1024x256xbf16, #tpu.memory_space<vmem>>, %arg2: memref<1x256xf32, #tpu.memory_space<vmem>>, %arg3: memref<256x128xbf16, #tpu.memory_space<vmem>>, %arg4: memref<1x128xf32, #tpu.memory_space<vmem>>, %arg5: memref<1x128xf32, #tpu.memory_space<vmem>>, %arg6: memref<1x128xf32, #tpu.memory_space<vmem>>, %arg7: memref<8x128xf32, #tpu.memory_space<vmem>>) attributes {dimension_semantics = [], scalar_prefetch = 0 : i64, scratch_operands = 0 : i64, tpu.core_type = #tpu.core_type<tc>} {
    %c0 = arith.constant 0 : index
    %c0_0 = arith.constant 0 : index
    %0 = vector.load %arg0[%c0, %c0_0] : memref<8x1024xf32, #tpu.memory_space<vmem>>, vector<8x1024xf32>
    %1 = arith.truncf %0 : vector<8x1024xf32> to vector<8x1024xbf16>
    %c0_1 = arith.constant 0 : index
    %c0_2 = arith.constant 0 : index
    %2 = vector.load %arg1[%c0_1, %c0_2] : memref<1024x256xbf16, #tpu.memory_space<vmem>>, vector<1024x256xbf16>
    %cst = arith.constant dense<0.000000e+00> : vector<8x256xf32>
    %3 = tpu.matmul %1, %2, %cst {dimension_numbers = #tpu.dot_dimension_numbers<[1], [0], [0], [1], [0, 0, 1, 1], [], []>} : vector<8x1024xbf16>, vector<1024x256xbf16>, vector<8x256xf32> -> vector<8x256xf32>
    %c0_3 = arith.constant 0 : index
    %c0_4 = arith.constant 0 : index
    %4 = vector.load %arg2[%c0_3, %c0_4] : memref<1x256xf32, #tpu.memory_space<vmem>>, vector<1x256xf32>
    %5 = vector.broadcast %4 : vector<1x256xf32> to vector<8x256xf32>
    %6 = arith.addf %3, %5 : vector<8x256xf32>
    %cst_5 = arith.constant 0.000000e+00 : f32
    %7 = vector.broadcast %cst_5 : f32 to vector<8x256xf32>
    %8 = arith.maximumf %6, %7 : vector<8x256xf32>
    %9 = arith.truncf %8 : vector<8x256xf32> to vector<8x256xbf16>
    %c0_6 = arith.constant 0 : index
    %c0_7 = arith.constant 0 : index
    %10 = vector.load %arg3[%c0_6, %c0_7] : memref<256x128xbf16, #tpu.memory_space<vmem>>, vector<256x128xbf16>
    %cst_8 = arith.constant dense<0.000000e+00> : vector<8x128xf32>
    %11 = tpu.matmul %9, %10, %cst_8 {dimension_numbers = #tpu.dot_dimension_numbers<[1], [0], [0], [1], [0, 0, 1, 1], [], []>} : vector<8x256xbf16>, vector<256x128xbf16>, vector<8x128xf32> -> vector<8x128xf32>
    %c0_9 = arith.constant 0 : index
    %c0_10 = arith.constant 0 : index
    %12 = vector.load %arg4[%c0_9, %c0_10] : memref<1x128xf32, #tpu.memory_space<vmem>>, vector<1x128xf32>
    %13 = vector.broadcast %12 : vector<1x128xf32> to vector<8x128xf32>
    %14 = arith.addf %11, %13 : vector<8x128xf32>
    %c0_11 = arith.constant 0 : index
    %c0_12 = arith.constant 0 : index
    %15 = vector.load %arg6[%c0_11, %c0_12] : memref<1x128xf32, #tpu.memory_space<vmem>>, vector<1x128xf32>
    %16 = vector.broadcast %15 : vector<1x128xf32> to vector<8x128xf32>
    %17 = arith.mulf %14, %16 : vector<8x128xf32>
    %cst_13 = arith.constant dense<0.000000e+00> : vector<8xf32>
    %18 = vector.multi_reduction <add>, %17, %cst_13 [1] : vector<8x128xf32> to vector<8xf32>
    %19 = vector.shape_cast %18 : vector<8xf32> to vector<8x1xf32>
    %c0_14 = arith.constant 0 : index
    %c0_15 = arith.constant 0 : index
    %20 = vector.load %arg5[%c0_14, %c0_15] : memref<1x128xf32, #tpu.memory_space<vmem>>, vector<1x128xf32>
    %21 = vector.broadcast %20 : vector<1x128xf32> to vector<8x128xf32>
    %22 = arith.mulf %14, %21 : vector<8x128xf32>
    %cst_16 = arith.constant dense<0.000000e+00> : vector<8xf32>
    %23 = vector.multi_reduction <add>, %22, %cst_16 [1] : vector<8x128xf32> to vector<8xf32>
    %24 = vector.shape_cast %23 : vector<8xf32> to vector<8x1xf32>
    %cst_17 = arith.constant 0.166666672 : f32
    %25 = vector.broadcast %cst_17 : f32 to vector<8x1xf32>
    %26 = arith.mulf %24, %25 : vector<8x1xf32>
    %27 = vector.broadcast %19 : vector<8x1xf32> to vector<8x128xf32>
    %28 = arith.addf %27, %14 : vector<8x128xf32>
    %29 = vector.broadcast %26 : vector<8x1xf32> to vector<8x128xf32>
    %30 = arith.subf %28, %29 : vector<8x128xf32>
    %c0_18 = arith.constant 0 : index
    %c0_19 = arith.constant 0 : index
    %31 = vector.load %arg7[%c0_18, %c0_19] : memref<8x128xf32, #tpu.memory_space<vmem>>, vector<8x128xf32>
    tpu.vector_store %arg7[%c0_18, %c0_19], %30 {strides = array<i32>} : memref<8x128xf32, #tpu.memory_space<vmem>>, vector<8x128xf32>,
    return
  }
}

</mosaic_0001>

<llo_original>
// kernel: tpu_custom_call.1
$region0: #{tpu_custom_call.1}
  #allocation0 [shape = 'u32[]', space=smem, size = 0x4, offset = 0x4, fixed_abs, tag = 'smem constant byte address 0x4 - core index']
  #allocation1 [shape = 'u32[72,128]{1,0:T(1,128)}', space=vmem, size = 0x9000, scoped, tag = 'internal scratch']
  %s0 = inlined_call_operand.hbm [shape: f32[8,1024], index: 0, kind: input, shape index: {}]
  %s1 = inlined_call_operand.hbm [shape: bf16[1024,256], index: 1, kind: input, shape index: {}]
  %s2 = inlined_call_operand.hbm [shape: f32[1,256], index: 2, kind: input, shape index: {}]
  %s3 = inlined_call_operand.hbm [shape: bf16[256,128], index: 3, kind: input, shape index: {}]
  %s4 = inlined_call_operand.vmem [shape: f32[1,128], index: 4, kind: input, shape index: {}]
  %s5 = inlined_call_operand.vmem [shape: f32[1,128], index: 5, kind: input, shape index: {}]
  %s6 = inlined_call_operand.vmem [shape: f32[1,128], index: 6, kind: input, shape index: {}]
  %s7 = inlined_call_operand.hbm [shape: f32[8,128], index: 7, kind: output, shape index: {}]
  %s8 = sld [smem:[#allocation0]]
  $region54: #{tpu_custom_call.1} parent=0
    _
  %s10 = ssub.s32 1, %s8
  %s11 = scalar_select 0, %s10, %s8
  $region1: #{tpu_custom_call.1} parent=0
    #allocation2 [shape = 'u8[32768]{0}', space=vmem, size = 0x8000, scoped, tag = 'input window, operand 0, single buffered']
    #allocation3 [shape = 's32[1]{0}', space=sflag, size = 0x4, scoped, tag = 'scoped memory for tpu_custom_call.1']
    #allocation4 [shape = 's32[1]{0}', space=sflag, size = 0x4, scoped, tag = 'scoped memory for tpu_custom_call.1']
    #allocation5 [shape = 'u8[524288]{0}', space=vmem, size = 0x80000, scoped, tag = 'input window, operand 1, single buffered']
    #allocation6 [shape = 's32[1]{0}', space=sflag, size = 0x4, scoped, tag = 'scoped memory for tpu_custom_call.1']
    #allocation7 [shape = 'u8[1024]{0}', space=vmem, size = 0x400, scoped, tag = 'input window, operand 2, single buffered']
    #allocation8 [shape = 'u8[65536]{0}', space=vmem, size = 0x10000, scoped, tag = 'input window, operand 3, single buffered']
    #allocation9 [shape = 's32[1]{0}', space=sflag, size = 0x4, scoped, tag = 'scoped memory for tpu_custom_call.1']
    #allocation10 [shape = 'u8[4096]{0}', space=vmem, size = 0x1000, scoped, tag = 'output window, operand 0, single buffered']
    %12 = vsyncpa [#allocation3], 0
    %13 = vsyncpa [#allocation6], 0
    %14 = vsyncpa [#allocation9], 0
    %15 = vsyncpa [#allocation4], 0
    // Predicated region
    $region2: #{tpu_custom_call.1} parent=1 // pred_check
      _
    $region3: #{tpu_custom_call.1} parent=1 // pred_check_branch
      %17 = sbr.rel (0) target = $region5
    $region4: #{tpu_custom_call.1} parent=1 // pred_region
      %19 = vsyncadd [#allocation3], 0
      %s21 = sshll.u32 %s0, 4
      %s22 = int_to_ptr.hbm [resolvable:$true] %s21
      %s23 = sshll.u32 [#allocation2], 4
      %s24 = int_to_ptr.vmem [resolvable:$true] %s23
      %26 = dma.hbm_to_vmem [thread:$0]  %s22, 1024, %s24, [#allocation3]
    $region5: #{tpu_custom_call.1} parent=1 // pred_fallthru
      _
    // Predicated region
    $region6: #{tpu_custom_call.1} parent=1 // pred_check
      _
    $region7: #{tpu_custom_call.1} parent=1 // pred_check_branch
      %28 = sbr.rel (0) target = $region9
    $region8: #{tpu_custom_call.1} parent=1 // pred_region
      %30 = vsyncadd [#allocation6], 0
      %s31 = sshll.u32 %s1, 4
      %s32 = int_to_ptr.hbm [resolvable:$true] %s31
      %s33 = sshll.u32 [#allocation5], 4
      %s34 = int_to_ptr.vmem [resolvable:$true] %s33
      %39 = dma.hbm_to_vmem [thread:$0]  %s32, 16384, %s34, [#allocation6], 128, 128, 8
    $region9: #{tpu_custom_call.1} parent=1 // pred_fallthru
      _
    // Predicated region
    $region10: #{tpu_custom_call.1} parent=1 // pred_check
      _
    $region11: #{tpu_custom_call.1} parent=1 // pred_check_branch
      %41 = sbr.rel (0) target = $region13
    $region12: #{tpu_custom_call.1} parent=1 // pred_region
      %43 = vsyncadd [#allocation6], 0
      %s45 = sshll.u32 %s2, 4
      %s46 = int_to_ptr.hbm [resolvable:$true] %s45
      %s47 = sshll.u32 [#allocation7], 4
      %s48 = int_to_ptr.vmem [resolvable:$true] %s47
      %50 = dma.hbm_to_vmem [thread:$0]  %s46, 32, %s48, [#allocation6]
    $region13: #{tpu_custom_call.1} parent=1 // pred_fallthru
      _
    // Predicated region
    $region14: #{tpu_custom_call.1} parent=1 // pred_check
      _
    $region15: #{tpu_custom_call.1} parent=1 // pred_check_branch
      %52 = sbr.rel (0) target = $region17
    $region16: #{tpu_custom_call.1} parent=1 // pred_region
      %54 = vsyncadd [#allocation9], 0
      %s55 = sshll.u32 %s3, 4
      %s56 = int_to_ptr.hbm [resolvable:$true] %s55
      %s57 = sshll.u32 [#allocation8], 4
      %s58 = int_to_ptr.vmem [resolvable:$true] %s57
      %63 = dma.hbm_to_vmem [thread:$0]  %s56, 2048, %s58, [#allocation9], 64, 64, 4
    $region17: #{tpu_custom_call.1} parent=1 // pred_fallthru
      _
    // Predicated region
    $region18: #{tpu_custom_call.1} parent=1 // pred_check
      _
    $region19: #{tpu_custom_call.1} parent=1 // pred_check_branch
      %65 = sbr.rel (0) target = $region21
    $region20: #{tpu_custom_call.1} parent=1 // pred_region
      _
    $region21: #{tpu_custom_call.1} parent=1 // pred_fallthru
      _
    // Predicated region
    $region22: #{tpu_custom_call.1} parent=1 // pred_check
      _
    $region23: #{tpu_custom_call.1} parent=1 // pred_check_branch
      %67 = sbr.rel (0) target = $region25
    $region24: #{tpu_custom_call.1} parent=1 // pred_region
      _
    $region25: #{tpu_custom_call.1} parent=1 // pred_fallthru
      _
    // Predicated region
    $region26: #{tpu_custom_call.1} parent=1 // pred_check
      _
    $region27: #{tpu_custom_call.1} parent=1 // pred_check_branch
      %69 = sbr.rel (0) target = $region29
    $region28: #{tpu_custom_call.1} parent=1 // pred_region
      _
    $region29: #{tpu_custom_call.1} parent=1 // pred_fallthru
      _
    // Predicated region
    $region30: #{tpu_custom_call.1} parent=1 // pred_check
      _
    $region31: #{tpu_custom_call.1} parent=1 // pred_check_branch
      %71 = sbr.rel (0) target = $region33
    $region32: #{tpu_custom_call.1} parent=1 // pred_region
      %73 = dma.done [#allocation3], 1024
    $region33: #{tpu_custom_call.1} parent=1 // pred_fallthru
      _
    // Predicated region
    $region34: #{tpu_custom_call.1} parent=1 // pred_check
      _
    $region35: #{tpu_custom_call.1} parent=1 // pred_check_branch
      %75 = sbr.rel (0) target = $region37
    $region36: #{tpu_custom_call.1} parent=1 // pred_region
      %77 = dma.done [#allocation6], 16384
    $region37: #{tpu_custom_call.1} parent=1 // pred_fallthru
      _
    // Predicated region
    $region38: #{tpu_custom_call.1} parent=1 // pred_check
      _
    $region39: #{tpu_custom_call.1} parent=1 // pred_check_branch
      %79 = sbr.rel (0) target = $region41
    $region40: #{tpu_custom_call.1} parent=1 // pred_region
      %81 = dma.done [#allocation6], 32
    $region41: #{tpu_custom_call.1} parent=1 // pred_fallthru
      _
    // Predicated region
    $region42: #{tpu_custom_call.1} parent=1 // pred_check
      _
    $region43: #{tpu_custom_call.1} parent=1 // pred_check_branch
      %83 = sbr.rel (0) target = $region45
    $region44: #{tpu_custom_call.1} parent=1 // pred_region
      %85 = dma.done [#allocation9], 2048
    $region45: #{tpu_custom_call.1} parent=1 // pred_fallthru
      _
    %v86 = vld [vmem:[#allocation2] sm:$0xff]
    %v87 = vld [vmem:[#allocation2 + $0x8] sm:$0xff]
    %v88 = vld [vmem:[#allocation2 + $0x10] sm:$0xff]
    %v89 = vld [vmem:[#allocation2 + $0x18] sm:$0xff]
    %v90 = vld [vmem:[#allocation2 + $0x20] sm:$0xff]
    %v91 = vld [vmem:[#allocation2 + $0x28] sm:$0xff]
    %v92 = vld [vmem:[#allocation2 + $0x30] sm:$0xff]
    %v93 = vld [vmem:[#allocation2 + $0x38] sm:$0xff]
    %v94 = vpack.c.bf16 %v86, %v86
    %v95 = vpack.c.bf16 %v87, %v87
    %v96 = vpack.c.bf16 %v88, %v88
    %v97 = vpack.c.bf16 %v89, %v89
    %v98 = vpack.c.bf16 %v90, %v90
    %v99 = vpack.c.bf16 %v91, %v91
    %v100 = vpack.c.bf16 %v92, %v92
    %v101 = vpack.c.bf16 %v93, %v93
    %v102 = vld [vmem:[#allocation5] sm:$0xff]
    %v103 = vld [vmem:[#allocation5 + $0x8] sm:$0xff]
    %v104 = vld [vmem:[#allocation5 + $0x10] sm:$0xff]
    %v105 = vld [vmem:[#allocation5 + $0x18] sm:$0xff]
    %v106 = vld [vmem:[#allocation5 + $0x20] sm:$0xff]
    %v107 = vld [vmem:[#allocation5 + $0x28] sm:$0xff]
    %v108 = vld [vmem:[#allocation5 + $0x30] sm:$0xff]
    %v109 = vld [vmem:[#allocation5 + $0x38] sm:$0xff]
    %v110 = vld [vmem:[#allocation5 + $0x40] sm:$0xff]
    %v111 = vld [vmem:[#allocation5 + $0x48] sm:$0xff]
    %v112 = vld [vmem:[#allocation5 + $0x50] sm:$0xff]
    %v113 = vld [vmem:[#allocation5 + $0x58] sm:$0xff]
    %v114 = vld [vmem:[#allocation5 + $0x60] sm:$0xff]
    %v115 = vld [vmem:[#allocation5 + $0x68] sm:$0xff]
    %v116 = vld [vmem:[#allocation5 + $0x70] sm:$0xff]
    %v117 = vld [vmem:[#allocation5 + $0x78] sm:$0xff]
    %v118 = vld [vmem:[#allocation5 + $0x80] sm:$0xff]
    %v119 = vld [vmem:[#allocation5 + $0x88] sm:$0xff]
    %v120 = vld [vmem:[#allocation5 + $0x90] sm:$0xff]
    %v121 = vld [vmem:[#allocation5 + $0x98] sm:$0xff]
    %v122 = vld [vmem:[#allocation5 + $0xa0] sm:$0xff]
    %v123 = vld [vmem:[#allocation5 + $0xa8] sm:$0xff]
    %v124 = vld [vmem:[#allocation5 + $0xb0] sm:$0xff]
    %v125 = vld [vmem:[#allocation5 + $0xb8] sm:$0xff]
    %v126 = vld [vmem:[#allocation5 + $0xc0] sm:$0xff]
    %v127 = vld [vmem:[#allocation5 + $0xc8] sm:$0xff]
    %v128 = vld [vmem:[#allocation5 + $0xd0] sm:$0xff]
    %v129 = vld [vmem:[#allocation5 + $0xd8] sm:$0xff]
    %v130 = vld [vmem:[#allocation5 + $0xe0] sm:$0xff]
    %v131 = vld [vmem:[#allocation5 + $0xe8] sm:$0xff]
    %v132 = vld [vmem:[#allocation5 + $0xf0] sm:$0xff]
    %v133 = vld [vmem:[#allocation5 + $0xf8] sm:$0xff]
    %v134 = vld [vmem:[#allocation5 + $0x100] sm:$0xff]
    %v135 = vld [vmem:[#allocation5 + $0x108] sm:$0xff]
    %v136 = vld [vmem:[#allocation5 + $0x110] sm:$0xff]
    %v137 = vld [vmem:[#allocation5 + $0x118] sm:$0xff]
    %v138 = vld [vmem:[#allocation5 + $0x120] sm:$0xff]
    %v139 = vld [vmem:[#allocation5 + $0x128] sm:$0xff]
    %v140 = vld [vmem:[#allocation5 + $0x130] sm:$0xff]
    %v141 = vld [vmem:[#allocation5 + $0x138] sm:$0xff]
    %v142 = vld [vmem:[#allocation5 + $0x140] sm:$0xff]
    %v143 = vld [vmem:[#allocation5 + $0x148] sm:$0xff]
    %v144 = vld [vmem:[#allocation5 + $0x150] sm:$0xff]
    %v145 = vld [vmem:[#allocation5 + $0x158] sm:$0xff]
    %v146 = vld [vmem:[#allocation5 + $0x160] sm:$0xff]
    %v147 = vld [vmem:[#allocation5 + $0x168] sm:$0xff]
    %v148 = vld [vmem:[#allocation5 + $0x170] sm:$0xff]
    %v149 = vld [vmem:[#allocation5 + $0x178] sm:$0xff]
    %v150 = vld [vmem:[#allocation5 + $0x180] sm:$0xff]
    %v151 = vld [vmem:[#allocation5 + $0x188] sm:$0xff]
    %v152 = vld [vmem:[#allocation5 + $0x190] sm:$0xff]
    %v153 = vld [vmem:[#allocation5 + $0x198] sm:$0xff]
    %v154 = vld [vmem:[#allocation5 + $0x1a0] sm:$0xff]
    %v155 = vld [vmem:[#allocation5 + $0x1a8] sm:$0xff]
    %v156 = vld [vmem:[#allocation5 + $0x1b0] sm:$0xff]
    %v157 = vld [vmem:[#allocation5 + $0x1b8] sm:$0xff]
    %v158 = vld [vmem:[#allocation5 + $0x1c0] sm:$0xff]
    %v159 = vld [vmem:[#allocation5 + $0x1c8] sm:$0xff]
    %v160 = vld [vmem:[#allocation5 + $0x1d0] sm:$0xff]
    %v161 = vld [vmem:[#allocation5 + $0x1d8] sm:$0xff]
    %v162 = vld [vmem:[#allocation5 + $0x1e0] sm:$0xff]
    %v163 = vld [vmem:[#allocation5 + $0x1e8] sm:$0xff]
    %v164 = vld [vmem:[#allocation5 + $0x1f0] sm:$0xff]
    %v165 = vld [vmem:[#allocation5 + $0x1f8] sm:$0xff]
    %v166 = vld [vmem:[#allocation5 + $0x200] sm:$0xff]
    %v167 = vld [vmem:[#allocation5 + $0x208] sm:$0xff]
    %v168 = vld [vmem:[#allocation5 + $0x210] sm:$0xff]
    %v169 = vld [vmem:[#allocation5 + $0x218] sm:$0xff]
    %v170 = vld [vmem:[#allocation5 + $0x220] sm:$0xff]
    %v171 = vld [vmem:[#allocation5 + $0x228] sm:$0xff]
    %v172 = vld [vmem:[#allocation5 + $0x230] sm:$0xff]
    %v173 = vld [vmem:[#allocation5 + $0x238] sm:$0xff]
    %v174 = vld [vmem:[#allocation5 + $0x240] sm:$0xff]
    %v175 = vld [vmem:[#allocation5 + $0x248] sm:$0xff]
    %v176 = vld [vmem:[#allocation5 + $0x250] sm:$0xff]
    %v177 = vld [vmem:[#allocation5 + $0x258] sm:$0xff]
    %v178 = vld [vmem:[#allocation5 + $0x260] sm:$0xff]
    %v179 = vld [vmem:[#allocation5 + $0x268] sm:$0xff]
    %v180 = vld [vmem:[#allocation5 + $0x270] sm:$0xff]
    %v181 = vld [vmem:[#allocation5 + $0x278] sm:$0xff]
    %v182 = vld [vmem:[#allocation5 + $0x280] sm:$0xff]
    %v183 = vld [vmem:[#allocation5 + $0x288] sm:$0xff]
    %v184 = vld [vmem:[#allocation5 + $0x290] sm:$0xff]
    %v185 = vld [vmem:[#allocation5 + $0x298] sm:$0xff]
    %v186 = vld [vmem:[#allocation5 + $0x2a0] sm:$0xff]
    %v187 = vld [vmem:[#allocation5 + $0x2a8] sm:$0xff]
    %v188 = vld [vmem:[#allocation5 + $0x2b0] sm:$0xff]
    %v189 = vld [vmem:[#allocation5 + $0x2b8] sm:$0xff]
    %v190 = vld [vmem:[#allocation5 + $0x2c0] sm:$0xff]
    %v191 = vld [vmem:[#allocation5 + $0x2c8] sm:$0xff]
    %v192 = vld [vmem:[#allocation5 + $0x2d0] sm:$0xff]
    %v193 = vld [vmem:[#allocation5 + $0x2d8] sm:$0xff]
    %v194 = vld [vmem:[#allocation5 + $0x2e0] sm:$0xff]
    %v195 = vld [vmem:[#allocation5 + $0x2e8] sm:$0xff]
    %v196 = vld [vmem:[#allocation5 + $0x2f0] sm:$0xff]
    %v197 = vld [vmem:[#allocation5 + $0x2f8] sm:$0xff]
    %v198 = vld [vmem:[#allocation5 + $0x300] sm:$0xff]
    %v199 = vld [vmem:[#allocation5 + $0x308] sm:$0xff]
    %v200 = vld [vmem:[#allocation5 + $0x310] sm:$0xff]
    %v201 = vld [vmem:[#allocation5 + $0x318] sm:$0xff]
    %v202 = vld [vmem:[#allocation5 + $0x320] sm:$0xff]
    %v203 = vld [vmem:[#allocation5 + $0x328] sm:$0xff]
    %v204 = vld [vmem:[#allocation5 + $0x330] sm:$0xff]
    %v205 = vld [vmem:[#allocation5 + $0x338] sm:$0xff]
    %v206 = vld [vmem:[#allocation5 + $0x340] sm:$0xff]
    %v207 = vld [vmem:[#allocation5 + $0x348] sm:$0xff]
    %v208 = vld [vmem:[#allocation5 + $0x350] sm:$0xff]
    %v209 = vld [vmem:[#allocation5 + $0x358] sm:$0xff]
    %v210 = vld [vmem:[#allocation5 + $0x360] sm:$0xff]
    %v211 = vld [vmem:[#allocation5 + $0x368] sm:$0xff]
    %v212 = vld [vmem:[#allocation5 + $0x370] sm:$0xff]
    %v213 = vld [vmem:[#allocation5 + $0x378] sm:$0xff]
    %v214 = vld [vmem:[#allocation5 + $0x380] sm:$0xff]
    %v215 = vld [vmem:[#allocation5 + $0x388] sm:$0xff]
    %v216 = vld [vmem:[#allocation5 + $0x390] sm:$0xff]
    %v217 = vld [vmem:[#allocation5 + $0x398] sm:$0xff]
    %v218 = vld [vmem:[#allocation5 + $0x3a0] sm:$0xff]
    %v219 = vld [vmem:[#allocation5 + $0x3a8] sm:$0xff]
    %v220 = vld [vmem:[#allocation5 + $0x3b0] sm:$0xff]
    %v221 = vld [vmem:[#allocation5 + $0x3b8] sm:$0xff]
    %v222 = vld [vmem:[#allocation5 + $0x3c0] sm:$0xff]
    %v223 = vld [vmem:[#allocation5 + $0x3c8] sm:$0xff]
    %v224 = vld [vmem:[#allocation5 + $0x3d0] sm:$0xff]
    %v225 = vld [vmem:[#allocation5 + $0x3d8] sm:$0xff]
    %v226 = vld [vmem:[#allocation5 + $0x3e0] sm:$0xff]
    %v227 = vld [vmem:[#allocation5 + $0x3e8] sm:$0xff]
    %v228 = vld [vmem:[#allocation5 + $0x3f0] sm:$0xff]
    %v229 = vld [vmem:[#allocation5 + $0x3f8] sm:$0xff]
    %v230 = vld [vmem:[#allocation7] sm:$0x3]
    %v232 = vperm.slane %v230, 0
    %v233 = vperm.slane %v230, 1
    %v364 = vunpack.c.l.b16 %v102
    %v365 = vunpack.c.h.b16 %v102
    %v366 = vunpack.c.l.b16 %v103
    %v367 = vunpack.c.h.b16 %v103
    %v368 = vunpack.c.l.b16 %v104
    %v369 = vunpack.c.h.b16 %v104
    %v370 = vunpack.c.l.b16 %v105
    %v371 = vunpack.c.h.b16 %v105
    %v372 = vunpack.c.l.b16 %v106
    %v373 = vunpack.c.h.b16 %v106
    %v374 = vunpack.c.l.b16 %v107
    %v375 = vunpack.c.h.b16 %v107
    %v376 = vunpack.c.l.b16 %v108
    %v377 = vunpack.c.h.b16 %v108
    %v378 = vunpack.c.l.b16 %v109
    %v379 = vunpack.c.h.b16 %v109
    %v380 = vunpack.c.l.b16 %v110
    %v381 = vunpack.c.h.b16 %v110
    %v382 = vunpack.c.l.b16 %v111
    %v383 = vunpack.c.h.b16 %v111
    %v384 = vunpack.c.l.b16 %v112
    %v385 = vunpack.c.h.b16 %v112
    %v386 = vunpack.c.l.b16 %v113
    %v387 = vunpack.c.h.b16 %v113
    %v388 = vunpack.c.l.b16 %v114
    %v389 = vunpack.c.h.b16 %v114
    %v390 = vunpack.c.l.b16 %v115
    %v391 = vunpack.c.h.b16 %v115
    %v392 = vunpack.c.l.b16 %v116
    %v393 = vunpack.c.h.b16 %v116
    %v394 = vunpack.c.l.b16 %v117
    %v395 = vunpack.c.h.b16 %v117
    %v396 = vunpack.c.l.b16 %v118
    %v397 = vunpack.c.h.b16 %v118
    %v398 = vunpack.c.l.b16 %v119
    %v399 = vunpack.c.h.b16 %v119
    %v400 = vunpack.c.l.b16 %v120
    %v401 = vunpack.c.h.b16 %v120
    %v402 = vunpack.c.l.b16 %v121
    %v403 = vunpack.c.h.b16 %v121
    %v404 = vunpack.c.l.b16 %v122
    %v405 = vunpack.c.h.b16 %v122
    %v406 = vunpack.c.l.b16 %v123
    %v407 = vunpack.c.h.b16 %v123
    %v408 = vunpack.c.l.b16 %v124
    %v409 = vunpack.c.h.b16 %v124
    %v410 = vunpack.c.l.b16 %v125
    %v411 = vunpack.c.h.b16 %v125
    %v412 = vunpack.c.l.b16 %v126
    %v413 = vunpack.c.h.b16 %v126
    %v414 = vunpack.c.l.b16 %v127
    %v415 = vunpack.c.h.b16 %v127
    %v416 = vunpack.c.l.b16 %v128
    %v417 = vunpack.c.h.b16 %v128
    %v418 = vunpack.c.l.b16 %v129
    %v419 = vunpack.c.h.b16 %v129
    %v420 = vunpack.c.l.b16 %v130
    %v421 = vunpack.c.h.b16 %v130
    %v422 = vunpack.c.l.b16 %v131
    %v423 = vunpack.c.h.b16 %v131
    %v424 = vunpack.c.l.b16 %v132
    %v425 = vunpack.c.h.b16 %v132
    %v426 = vunpack.c.l.b16 %v133
    %v427 = vunpack.c.h.b16 %v133
    %v428 = vunpack.c.l.b16 %v134
    %v429 = vunpack.c.h.b16 %v134
    %v430 = vunpack.c.l.b16 %v135
    %v431 = vunpack.c.h.b16 %v135
    %v432 = vunpack.c.l.b16 %v136
    %v433 = vunpack.c.h.b16 %v136
    %v434 = vunpack.c.l.b16 %v137
    %v435 = vunpack.c.h.b16 %v137
    %v436 = vunpack.c.l.b16 %v138
    %v437 = vunpack.c.h.b16 %v138
    %v438 = vunpack.c.l.b16 %v139
    %v439 = vunpack.c.h.b16 %v139
    %v440 = vunpack.c.l.b16 %v140
    %v441 = vunpack.c.h.b16 %v140
    %v442 = vunpack.c.l.b16 %v141
    %v443 = vunpack.c.h.b16 %v141
    %v444 = vunpack.c.l.b16 %v142
    %v445 = vunpack.c.h.b16 %v142
    %v446 = vunpack.c.l.b16 %v143
    %v447 = vunpack.c.h.b16 %v143
    %v448 = vunpack.c.l.b16 %v144
    %v449 = vunpack.c.h.b16 %v144
    %v450 = vunpack.c.l.b16 %v145
    %v451 = vunpack.c.h.b16 %v145
    %v452 = vunpack.c.l.b16 %v146
    %v453 = vunpack.c.h.b16 %v146
    %v454 = vunpack.c.l.b16 %v147
    %v455 = vunpack.c.h.b16 %v147
    %v456 = vunpack.c.l.b16 %v148
    %v457 = vunpack.c.h.b16 %v148
    %v458 = vunpack.c.l.b16 %v149
    %v459 = vunpack.c.h.b16 %v149
    %v460 = vunpack.c.l.b16 %v150
    %v461 = vunpack.c.h.b16 %v150
    %v462 = vunpack.c.l.b16 %v151
    %v463 = vunpack.c.h.b16 %v151
    %v464 = vunpack.c.l.b16 %v152
    %v465 = vunpack.c.h.b16 %v152
    %v466 = vunpack.c.l.b16 %v153
    %v467 = vunpack.c.h.b16 %v153
    %v468 = vunpack.c.l.b16 %v154
    %v469 = vunpack.c.h.b16 %v154
    %v470 = vunpack.c.l.b16 %v155
    %v471 = vunpack.c.h.b16 %v155
    %v472 = vunpack.c.l.b16 %v156
    %v473 = vunpack.c.h.b16 %v156
    %v474 = vunpack.c.l.b16 %v157
    %v475 = vunpack.c.h.b16 %v157
    %v476 = vunpack.c.l.b16 %v158
    %v477 = vunpack.c.h.b16 %v158
    %v478 = vunpack.c.l.b16 %v159
    %v479 = vunpack.c.h.b16 %v159
    %v480 = vunpack.c.l.b16 %v160
    %v481 = vunpack.c.h.b16 %v160
    %v482 = vunpack.c.l.b16 %v161
    %v483 = vunpack.c.h.b16 %v161
    %v484 = vunpack.c.l.b16 %v162
    %v485 = vunpack.c.h.b16 %v162
    %v486 = vunpack.c.l.b16 %v163
    %v487 = vunpack.c.h.b16 %v163
    %v488 = vunpack.c.l.b16 %v164
    %v489 = vunpack.c.h.b16 %v164
    %v490 = vunpack.c.l.b16 %v165
    %v491 = vunpack.c.h.b16 %v165
    %v492 = vunpack.c.l.b16 %v166
    %v493 = vunpack.c.h.b16 %v166
    %v494 = vunpack.c.l.b16 %v167
    %v495 = vunpack.c.h.b16 %v167
    %v496 = vunpack.c.l.b16 %v168
    %v497 = vunpack.c.h.b16 %v168
    %v498 = vunpack.c.l.b16 %v169
    %v499 = vunpack.c.h.b16 %v169
    %v500 = vunpack.c.l.b16 %v170
    %v501 = vunpack.c.h.b16 %v170
    %v502 = vunpack.c.l.b16 %v171
    %v503 = vunpack.c.h.b16 %v171
    %v504 = vunpack.c.l.b16 %v172
    %v505 = vunpack.c.h.b16 %v172
    %v506 = vunpack.c.l.b16 %v173
    %v507 = vunpack.c.h.b16 %v173
    %v508 = vunpack.c.l.b16 %v174
    %v509 = vunpack.c.h.b16 %v174
    %v510 = vunpack.c.l.b16 %v175
    %v511 = vunpack.c.h.b16 %v175
    %v512 = vunpack.c.l.b16 %v176
    %v513 = vunpack.c.h.b16 %v176
    %v514 = vunpack.c.l.b16 %v177
    %v515 = vunpack.c.h.b16 %v177
    %v516 = vunpack.c.l.b16 %v178
    %v517 = vunpack.c.h.b16 %v178
    %v518 = vunpack.c.l.b16 %v179
    %v519 = vunpack.c.h.b16 %v179
    %v520 = vunpack.c.l.b16 %v180
    %v521 = vunpack.c.h.b16 %v180
    %v522 = vunpack.c.l.b16 %v181
    %v523 = vunpack.c.h.b16 %v181
    %v524 = vunpack.c.l.b16 %v182
    %v525 = vunpack.c.h.b16 %v182
    %v526 = vunpack.c.l.b16 %v183
    %v527 = vunpack.c.h.b16 %v183
    %v528 = vunpack.c.l.b16 %v184
    %v529 = vunpack.c.h.b16 %v184
    %v530 = vunpack.c.l.b16 %v185
    %v531 = vunpack.c.h.b16 %v185
    %v532 = vunpack.c.l.b16 %v186
    %v533 = vunpack.c.h.b16 %v186
    %v534 = vunpack.c.l.b16 %v187
    %v535 = vunpack.c.h.b16 %v187
    %v536 = vunpack.c.l.b16 %v188
    %v537 = vunpack.c.h.b16 %v188
    %v538 = vunpack.c.l.b16 %v189
    %v539 = vunpack.c.h.b16 %v189
    %v540 = vunpack.c.l.b16 %v190
    %v541 = vunpack.c.h.b16 %v190
    %v542 = vunpack.c.l.b16 %v191
    %v543 = vunpack.c.h.b16 %v191
    %v544 = vunpack.c.l.b16 %v192
    %v545 = vunpack.c.h.b16 %v192
    %v546 = vunpack.c.l.b16 %v193
    %v547 = vunpack.c.h.b16 %v193
    %v548 = vunpack.c.l.b16 %v194
    %v549 = vunpack.c.h.b16 %v194
    %v550 = vunpack.c.l.b16 %v195
    %v551 = vunpack.c.h.b16 %v195
    %v552 = vunpack.c.l.b16 %v196
    %v553 = vunpack.c.h.b16 %v196
    %v554 = vunpack.c.l.b16 %v197
    %v555 = vunpack.c.h.b16 %v197
    %v556 = vunpack.c.l.b16 %v198
    %v557 = vunpack.c.h.b16 %v198
    %v558 = vunpack.c.l.b16 %v199
    %v559 = vunpack.c.h.b16 %v199
    %v560 = vunpack.c.l.b16 %v200
    %v561 = vunpack.c.h.b16 %v200
    %v562 = vunpack.c.l.b16 %v201
    %v563 = vunpack.c.h.b16 %v201
    %v564 = vunpack.c.l.b16 %v202
    %v565 = vunpack.c.h.b16 %v202
    %v566 = vunpack.c.l.b16 %v203
    %v567 = vunpack.c.h.b16 %v203
    %v568 = vunpack.c.l.b16 %v204
    %v569 = vunpack.c.h.b16 %v204
    %v570 = vunpack.c.l.b16 %v205
    %v571 = vunpack.c.h.b16 %v205
    %v572 = vunpack.c.l.b16 %v206
    %v573 = vunpack.c.h.b16 %v206
    %v574 = vunpack.c.l.b16 %v207
    %v575 = vunpack.c.h.b16 %v207
    %v576 = vunpack.c.l.b16 %v208
    %v577 = vunpack.c.h.b16 %v208
    %v578 = vunpack.c.l.b16 %v209
    %v579 = vunpack.c.h.b16 %v209
    %v580 = vunpack.c.l.b16 %v210
    %v581 = vunpack.c.h.b16 %v210
    %v582 = vunpack.c.l.b16 %v211
    %v583 = vunpack.c.h.b16 %v211
    %v584 = vunpack.c.l.b16 %v212
    %v585 = vunpack.c.h.b16 %v212
    %v586 = vunpack.c.l.b16 %v213
    %v587 = vunpack.c.h.b16 %v213
    %v588 = vunpack.c.l.b16 %v214
    %v589 = vunpack.c.h.b16 %v214
    %v590 = vunpack.c.l.b16 %v215
    %v591 = vunpack.c.h.b16 %v215
    %v592 = vunpack.c.l.b16 %v216
    %v593 = vunpack.c.h.b16 %v216
    %v594 = vunpack.c.l.b16 %v217
    %v595 = vunpack.c.h.b16 %v217
    %v596 = vunpack.c.l.b16 %v218
    %v597 = vunpack.c.h.b16 %v218
    %v598 = vunpack.c.l.b16 %v219
    %v599 = vunpack.c.h.b16 %v219
    %v600 = vunpack.c.l.b16 %v220
    %v601 = vunpack.c.h.b16 %v220
    %v602 = vunpack.c.l.b16 %v221
    %v603 = vunpack.c.h.b16 %v221
    %v604 = vunpack.c.l.b16 %v222
    %v605 = vunpack.c.h.b16 %v222
    %v606 = vunpack.c.l.b16 %v223
    %v607 = vunpack.c.h.b16 %v223
    %v608 = vunpack.c.l.b16 %v224
    %v609 = vunpack.c.h.b16 %v224
    %v610 = vunpack.c.l.b16 %v225
    %v611 = vunpack.c.h.b16 %v225
    %v612 = vunpack.c.l.b16 %v226
    %v613 = vunpack.c.h.b16 %v226
    %v614 = vunpack.c.l.b16 %v227
    %v615 = vunpack.c.h.b16 %v227
    %v616 = vunpack.c.l.b16 %v228
    %v617 = vunpack.c.h.b16 %v228
    %v618 = vunpack.c.l.b16 %v229
    %v619 = vunpack.c.h.b16 %v229
    %v620 = vpack.c.b16 %v366, %v364
    %v621 = vpack.c.b16 %v367, %v365
    %v622 = vpack.c.b16 %v370, %v368
    %v623 = vpack.c.b16 %v371, %v369
    %v624 = vpack.c.b16 %v374, %v372
    %v625 = vpack.c.b16 %v375, %v373
    %v626 = vpack.c.b16 %v378, %v376
    %v627 = vpack.c.b16 %v379, %v377
    %v628 = vpack.c.b16 %v382, %v380
    %v629 = vpack.c.b16 %v383, %v381
    %v630 = vpack.c.b16 %v386, %v384
    %v631 = vpack.c.b16 %v387, %v385
    %v632 = vpack.c.b16 %v390, %v388
    %v633 = vpack.c.b16 %v391, %v389
    %v634 = vpack.c.b16 %v394, %v392
    %v635 = vpack.c.b16 %v395, %v393
    %v636 = vpack.c.b16 %v398, %v396
    %v637 = vpack.c.b16 %v399, %v397
    %v638 = vpack.c.b16 %v402, %v400
    %v639 = vpack.c.b16 %v403, %v401
    %v640 = vpack.c.b16 %v406, %v404
    %v641 = vpack.c.b16 %v407, %v405
    %v642 = vpack.c.b16 %v410, %v408
    %v643 = vpack.c.b16 %v411, %v409
    %v644 = vpack.c.b16 %v414, %v412
    %v645 = vpack.c.b16 %v415, %v413
    %v646 = vpack.c.b16 %v418, %v416
    %v647 = vpack.c.b16 %v419, %v417
    %v648 = vpack.c.b16 %v422, %v420
    %v649 = vpack.c.b16 %v423, %v421
    %v650 = vpack.c.b16 %v426, %v424
    %v651 = vpack.c.b16 %v427, %v425
    %v652 = vpack.c.b16 %v430, %v428
    %v653 = vpack.c.b16 %v431, %v429
    %v654 = vpack.c.b16 %v434, %v432
    %v655 = vpack.c.b16 %v435, %v433
    %v656 = vpack.c.b16 %v438, %v436
    %v657 = vpack.c.b16 %v439, %v437
    %v658 = vpack.c.b16 %v442, %v440
    %v659 = vpack.c.b16 %v443, %v441
    %v660 = vpack.c.b16 %v446, %v444
    %v661 = vpack.c.b16 %v447, %v445
    %v662 = vpack.c.b16 %v450, %v448
    %v663 = vpack.c.b16 %v451, %v449
    %v664 = vpack.c.b16 %v454, %v452
    %v665 = vpack.c.b16 %v455, %v453
    %v666 = vpack.c.b16 %v458, %v456
    %v667 = vpack.c.b16 %v459, %v457
    %v668 = vpack.c.b16 %v462, %v460
    %v669 = vpack.c.b16 %v463, %v461
    %v670 = vpack.c.b16 %v466, %v464
    %v671 = vpack.c.b16 %v467, %v465
    %v672 = vpack.c.b16 %v470, %v468
    %v673 = vpack.c.b16 %v471, %v469
    %v674 = vpack.c.b16 %v474, %v472
    %v675 = vpack.c.b16 %v475, %v473
    %v676 = vpack.c.b16 %v478, %v476
    %v677 = vpack.c.b16 %v479, %v477
    %v678 = vpack.c.b16 %v482, %v480
    %v679 = vpack.c.b16 %v483, %v481
    %v680 = vpack.c.b16 %v486, %v484
    %v681 = vpack.c.b16 %v487, %v485
    %v682 = vpack.c.b16 %v490, %v488
    %v683 = vpack.c.b16 %v491, %v489
    %v684 = vpack.c.b16 %v494, %v492
    %v685 = vpack.c.b16 %v495, %v493
    %v686 = vpack.c.b16 %v498, %v496
    %v687 = vpack.c.b16 %v499, %v497
    %v688 = vpack.c.b16 %v502, %v500
    %v689 = vpack.c.b16 %v503, %v501
    %v690 = vpack.c.b16 %v506, %v504
    %v691 = vpack.c.b16 %v507, %v505
    %v692 = vpack.c.b16 %v510, %v508
    %v693 = vpack.c.b16 %v511, %v509
    %v694 = vpack.c.b16 %v514, %v512
    %v695 = vpack.c.b16 %v515, %v513
    %v696 = vpack.c.b16 %v518, %v516
    %v697 = vpack.c.b16 %v519, %v517
    %v698 = vpack.c.b16 %v522, %v520
    %v699 = vpack.c.b16 %v523, %v521
    %v700 = vpack.c.b16 %v526, %v524
    %v701 = vpack.c.b16 %v527, %v525
    %v702 = vpack.c.b16 %v530, %v528
    %v703 = vpack.c.b16 %v531, %v529
    %v704 = vpack.c.b16 %v534, %v532
    %v705 = vpack.c.b16 %v535, %v533
    %v706 = vpack.c.b16 %v538, %v536
    %v707 = vpack.c.b16 %v539, %v537
    %v708 = vpack.c.b16 %v542, %v540
    %v709 = vpack.c.b16 %v543, %v541
    %v710 = vpack.c.b16 %v546, %v544
    %v711 = vpack.c.b16 %v547, %v545
    %v712 = vpack.c.b16 %v550, %v548
    %v713 = vpack.c.b16 %v551, %v549
    %v714 = vpack.c.b16 %v554, %v552
    %v715 = vpack.c.b16 %v555, %v553
    %v716 = vpack.c.b16 %v558, %v556
    %v717 = vpack.c.b16 %v559, %v557
    %v718 = vpack.c.b16 %v562, %v560
    %v719 = vpack.c.b16 %v563, %v561
    %v720 = vpack.c.b16 %v566, %v564
    %v721 = vpack.c.b16 %v567, %v565
    %v722 = vpack.c.b16 %v570, %v568
    %v723 = vpack.c.b16 %v571, %v569
    %v724 = vpack.c.b16 %v574, %v572
    %v725 = vpack.c.b16 %v575, %v573
    %v726 = vpack.c.b16 %v578, %v576
    %v727 = vpack.c.b16 %v579, %v577
    %v728 = vpack.c.b16 %v582, %v580
    %v729 = vpack.c.b16 %v583, %v581
    %v730 = vpack.c.b16 %v586, %v584
    %v731 = vpack.c.b16 %v587, %v585
    %v732 = vpack.c.b16 %v590, %v588
    %v733 = vpack.c.b16 %v591, %v589
    %v734 = vpack.c.b16 %v594, %v592
    %v735 = vpack.c.b16 %v595, %v593
    %v736 = vpack.c.b16 %v598, %v596
    %v737 = vpack.c.b16 %v599, %v597
    %v738 = vpack.c.b16 %v602, %v600
    %v739 = vpack.c.b16 %v603, %v601
    %v740 = vpack.c.b16 %v606, %v604
    %v741 = vpack.c.b16 %v607, %v605
    %v742 = vpack.c.b16 %v610, %v608
    %v743 = vpack.c.b16 %v611, %v609
    %v744 = vpack.c.b16 %v614, %v612
    %v745 = vpack.c.b16 %v615, %v613
    %v746 = vpack.c.b16 %v618, %v616
    %v747 = vpack.c.b16 %v619, %v617
    %876 = vmatpush.bf16.msra.mxu0 %v634
    %877 = vmatpush.bf16.msra.mxu0 %v632
    %878 = vmatpush.bf16.msra.mxu0 %v630
    %879 = vmatpush.bf16.msra.mxu0 %v628
    %880 = vmatpush.bf16.msra.mxu0 %v626
    %881 = vmatpush.bf16.msra.mxu0 %v624
    %882 = vmatpush.bf16.msra.mxu0 %v622
    %883 = vmatpush.bf16.msra.mxu0 %v620
    %884 = vmatmul.bf16.gmra.mxu0 %v94
    %v885 = vpop.f32.mrf.mxu0
    %v886 = vadd.f32 %v232, %v885
    %v887 = vpop.f32.mrf.mxu0
    %888 = vdwg.mxu0
    %889 = vmatpush.bf16.msra.mxu0 %v650
    %890 = vmatpush.bf16.msra.mxu0 %v648
    %891 = vmatpush.bf16.msra.mxu0 %v646
    %892 = vmatpush.bf16.msra.mxu0 %v644
    %893 = vmatpush.bf16.msra.mxu0 %v642
    %894 = vmatpush.bf16.msra.mxu0 %v640
    %895 = vmatpush.bf16.msra.mxu0 %v638
    %896 = vmatpush.bf16.msra.mxu0 %v636
    %897 = vmatmul.bf16.gmra.mxu0 %v95
    %v898 = vpop.f32.mrf.mxu0
    %v899 = vadd.f32 %v886, %v898
    %v900 = vpop.f32.mrf.mxu0
    %901 = vdwg.mxu0
    %902 = vmatpush.bf16.msra.mxu0 %v666
    %903 = vmatpush.bf16.msra.mxu0 %v664
    %904 = vmatpush.bf16.msra.mxu0 %v662
    %905 = vmatpush.bf16.msra.mxu0 %v660
    %906 = vmatpush.bf16.msra.mxu0 %v658
    %907 = vmatpush.bf16.msra.mxu0 %v656
    %908 = vmatpush.bf16.msra.mxu0 %v654
    %909 = vmatpush.bf16.msra.mxu0 %v652
    %910 = vmatmul.bf16.gmra.mxu0 %v96
    %v911 = vpop.f32.mrf.mxu0
    %v912 = vadd.f32 %v899, %v911
    %v913 = vpop.f32.mrf.mxu0
    %914 = vdwg.mxu0
    %915 = vmatpush.bf16.msra.mxu0 %v682
    %916 = vmatpush.bf16.msra.mxu0 %v680
    %917 = vmatpush.bf16.msra.mxu0 %v678
    %918 = vmatpush.bf16.msra.mxu0 %v676
    %919 = vmatpush.bf16.msra.mxu0 %v674
    %920 = vmatpush.bf16.msra.mxu0 %v672
    %921 = vmatpush.bf16.msra.mxu0 %v670
    %922 = vmatpush.bf16.msra.mxu0 %v668
    %923 = vmatmul.bf16.gmra.mxu0 %v97
    %v924 = vpop.f32.mrf.mxu0
    %v925 = vadd.f32 %v912, %v924
    %v926 = vpop.f32.mrf.mxu0
    %927 = vdwg.mxu0
    %928 = vmatpush.bf16.msra.mxu0 %v698
    %929 = vmatpush.bf16.msra.mxu0 %v696
    %930 = vmatpush.bf16.msra.mxu0 %v694
    %931 = vmatpush.bf16.msra.mxu0 %v692
    %932 = vmatpush.bf16.msra.mxu0 %v690
    %933 = vmatpush.bf16.msra.mxu0 %v688
    %934 = vmatpush.bf16.msra.mxu0 %v686
    %935 = vmatpush.bf16.msra.mxu0 %v684
    %936 = vmatmul.bf16.gmra.mxu0 %v98
    %v937 = vpop.f32.mrf.mxu0
    %v938 = vadd.f32 %v925, %v937
    %v939 = vpop.f32.mrf.mxu0
    %940 = vdwg.mxu0
    %941 = vmatpush.bf16.msra.mxu0 %v714
    %942 = vmatpush.bf16.msra.mxu0 %v712
    %943 = vmatpush.bf16.msra.mxu0 %v710
    %944 = vmatpush.bf16.msra.mxu0 %v708
    %945 = vmatpush.bf16.msra.mxu0 %v706
    %946 = vmatpush.bf16.msra.mxu0 %v704
    %947 = vmatpush.bf16.msra.mxu0 %v702
    %948 = vmatpush.bf16.msra.mxu0 %v700
    %949 = vmatmul.bf16.gmra.mxu0 %v99
    %v950 = vpop.f32.mrf.mxu0
    %v951 = vadd.f32 %v938, %v950
    %v952 = vpop.f32.mrf.mxu0
    %953 = vdwg.mxu0
    %954 = vmatpush.bf16.msra.mxu0 %v730
    %955 = vmatpush.bf16.msra.mxu0 %v728
    %956 = vmatpush.bf16.msra.mxu0 %v726
    %957 = vmatpush.bf16.msra.mxu0 %v724
    %958 = vmatpush.bf16.msra.mxu0 %v722
    %959 = vmatpush.bf16.msra.mxu0 %v720
    %960 = vmatpush.bf16.msra.mxu0 %v718
    %961 = vmatpush.bf16.msra.mxu0 %v716
    %962 = vmatmul.bf16.gmra.mxu0 %v100
    %v963 = vpop.f32.mrf.mxu0
    %v964 = vadd.f32 %v951, %v963
    %v965 = vpop.f32.mrf.mxu0
    %966 = vdwg.mxu0
    %967 = vmatpush.bf16.msra.mxu0 %v746
    %968 = vmatpush.bf16.msra.mxu0 %v744
    %969 = vmatpush.bf16.msra.mxu0 %v742
    %970 = vmatpush.bf16.msra.mxu0 %v740
    %971 = vmatpush.bf16.msra.mxu0 %v738
    %972 = vmatpush.bf16.msra.mxu0 %v736
    %973 = vmatpush.bf16.msra.mxu0 %v734
    %974 = vmatpush.bf16.msra.mxu0 %v732
    %975 = vmatmul.bf16.gmra.mxu0 %v101
    %v976 = vpop.f32.mrf.mxu0
    %v977 = vadd.f32 %v964, %v976
    %v978 = vpop.f32.mrf.mxu0
    %979 = vdwg.mxu0
    %980 = vmatpush.bf16.msra.mxu0 %v635
    %981 = vmatpush.bf16.msra.mxu0 %v633
    %982 = vmatpush.bf16.msra.mxu0 %v631
    %983 = vmatpush.bf16.msra.mxu0 %v629
    %984 = vmatpush.bf16.msra.mxu0 %v627
    %985 = vmatpush.bf16.msra.mxu0 %v625
    %986 = vmatpush.bf16.msra.mxu0 %v623
    %987 = vmatpush.bf16.msra.mxu0 %v621
    %988 = vmatmul.bf16.gmra.mxu0 %v94
    %v989 = vpop.f32.mrf.mxu0
    %v990 = vadd.f32 %v233, %v989
    %v991 = vpop.f32.mrf.mxu0
    %992 = vdwg.mxu0
    %993 = vmatpush.bf16.msra.mxu0 %v651
    %994 = vmatpush.bf16.msra.mxu0 %v649
    %995 = vmatpush.bf16.msra.mxu0 %v647
    %996 = vmatpush.bf16.msra.mxu0 %v645
    %997 = vmatpush.bf16.msra.mxu0 %v643
    %998 = vmatpush.bf16.msra.mxu0 %v641
    %999 = vmatpush.bf16.msra.mxu0 %v639
    %1000 = vmatpush.bf16.msra.mxu0 %v637
    %1001 = vmatmul.bf16.gmra.mxu0 %v95
    %v1002 = vpop.f32.mrf.mxu0
    %v1003 = vadd.f32 %v990, %v1002
    %v1004 = vpop.f32.mrf.mxu0
    %1005 = vdwg.mxu0
    %1006 = vmatpush.bf16.msra.mxu0 %v667
    %1007 = vmatpush.bf16.msra.mxu0 %v665
    %1008 = vmatpush.bf16.msra.mxu0 %v663
    %1009 = vmatpush.bf16.msra.mxu0 %v661
    %1010 = vmatpush.bf16.msra.mxu0 %v659
    %1011 = vmatpush.bf16.msra.mxu0 %v657
    %1012 = vmatpush.bf16.msra.mxu0 %v655
    %1013 = vmatpush.bf16.msra.mxu0 %v653
    %1014 = vmatmul.bf16.gmra.mxu0 %v96
    %v1015 = vpop.f32.mrf.mxu0
    %v1016 = vadd.f32 %v1003, %v1015
    %v1017 = vpop.f32.mrf.mxu0
    %1018 = vdwg.mxu0
    %1019 = vmatpush.bf16.msra.mxu0 %v683
    %1020 = vmatpush.bf16.msra.mxu0 %v681
    %1021 = vmatpush.bf16.msra.mxu0 %v679
    %1022 = vmatpush.bf16.msra.mxu0 %v677
    %1023 = vmatpush.bf16.msra.mxu0 %v675
    %1024 = vmatpush.bf16.msra.mxu0 %v673
    %1025 = vmatpush.bf16.msra.mxu0 %v671
    %1026 = vmatpush.bf16.msra.mxu0 %v669
    %1027 = vmatmul.bf16.gmra.mxu0 %v97
    %v1028 = vpop.f32.mrf.mxu0
    %v1029 = vadd.f32 %v1016, %v1028
    %v1030 = vpop.f32.mrf.mxu0
    %1031 = vdwg.mxu0
    %1032 = vmatpush.bf16.msra.mxu0 %v699
    %1033 = vmatpush.bf16.msra.mxu0 %v697
    %1034 = vmatpush.bf16.msra.mxu0 %v695
    %1035 = vmatpush.bf16.msra.mxu0 %v693
    %1036 = vmatpush.bf16.msra.mxu0 %v691
    %1037 = vmatpush.bf16.msra.mxu0 %v689
    %1038 = vmatpush.bf16.msra.mxu0 %v687
    %1039 = vmatpush.bf16.msra.mxu0 %v685
    %1040 = vmatmul.bf16.gmra.mxu0 %v98
    %v1041 = vpop.f32.mrf.mxu0
    %v1042 = vadd.f32 %v1029, %v1041
    %v1043 = vpop.f32.mrf.mxu0
    %1044 = vdwg.mxu0
    %1045 = vmatpush.bf16.msra.mxu0 %v715
    %1046 = vmatpush.bf16.msra.mxu0 %v713
    %1047 = vmatpush.bf16.msra.mxu0 %v711
    %1048 = vmatpush.bf16.msra.mxu0 %v709
    %1049 = vmatpush.bf16.msra.mxu0 %v707
    %1050 = vmatpush.bf16.msra.mxu0 %v705
    %1051 = vmatpush.bf16.msra.mxu0 %v703
    %1052 = vmatpush.bf16.msra.mxu0 %v701
    %1053 = vmatmul.bf16.gmra.mxu0 %v99
    %v1054 = vpop.f32.mrf.mxu0
    %v1055 = vadd.f32 %v1042, %v1054
    %v1056 = vpop.f32.mrf.mxu0
    %1057 = vdwg.mxu0
    %1058 = vmatpush.bf16.msra.mxu0 %v731
    %1059 = vmatpush.bf16.msra.mxu0 %v729
    %1060 = vmatpush.bf16.msra.mxu0 %v727
    %1061 = vmatpush.bf16.msra.mxu0 %v725
    %1062 = vmatpush.bf16.msra.mxu0 %v723
    %1063 = vmatpush.bf16.msra.mxu0 %v721
    %1064 = vmatpush.bf16.msra.mxu0 %v719
    %1065 = vmatpush.bf16.msra.mxu0 %v717
    %1066 = vmatmul.bf16.gmra.mxu0 %v100
    %v1067 = vpop.f32.mrf.mxu0
    %v1068 = vadd.f32 %v1055, %v1067
    %v1069 = vpop.f32.mrf.mxu0
    %1070 = vdwg.mxu0
    %1071 = vmatpush.bf16.msra.mxu0 %v747
    %1072 = vmatpush.bf16.msra.mxu0 %v745
    %1073 = vmatpush.bf16.msra.mxu0 %v743
    %1074 = vmatpush.bf16.msra.mxu0 %v741
    %1075 = vmatpush.bf16.msra.mxu0 %v739
    %1076 = vmatpush.bf16.msra.mxu0 %v737
    %1077 = vmatpush.bf16.msra.mxu0 %v735
    %1078 = vmatpush.bf16.msra.mxu0 %v733
    %1079 = vmatmul.bf16.gmra.mxu0 %v101
    %v1080 = vpop.f32.mrf.mxu0
    %v1081 = vadd.f32 %v1068, %v1080
    %v1082 = vpop.f32.mrf.mxu0
    %1083 = vdwg.mxu0
    %v1084 = vmax.f32 %v977, 0.0
    %v1085 = vmax.f32 %v1081, 0.0
    %v1086 = vpack.c.bf16 %v1084, %v1084
    %v1087 = vpack.c.bf16 %v1085, %v1085
    %v1088 = vld [vmem:[#allocation8] sm:$0xf]
    %v1089 = vld [vmem:[#allocation8 + $0x4] sm:$0xf]
    %v1090 = vld [vmem:[#allocation8 + $0x8] sm:$0xf]
    %v1091 = vld [vmem:[#allocation8 + $0xc] sm:$0xf]
    %v1092 = vld [vmem:[#allocation8 + $0x10] sm:$0xf]
    %v1093 = vld [vmem:[#allocation8 + $0x14] sm:$0xf]
    %v1094 = vld [vmem:[#allocation8 + $0x18] sm:$0xf]
    %v1095 = vld [vmem:[#allocation8 + $0x1c] sm:$0xf]
    %v1096 = vld [vmem:[#allocation8 + $0x20] sm:$0xf]
    %v1097 = vld [vmem:[#allocation8 + $0x24] sm:$0xf]
    %v1098 = vld [vmem:[#allocation8 + $0x28] sm:$0xf]
    %v1099 = vld [vmem:[#allocation8 + $0x2c] sm:$0xf]
    %v1100 = vld [vmem:[#allocation8 + $0x30] sm:$0xf]
    %v1101 = vld [vmem:[#allocation8 + $0x34] sm:$0xf]
    %v1102 = vld [vmem:[#allocation8 + $0x38] sm:$0xf]
    %v1103 = vld [vmem:[#allocation8 + $0x3c] sm:$0xf]
    %v1104 = vld [vmem:[#allocation8 + $0x40] sm:$0xf]
    %v1105 = vld [vmem:[#allocation8 + $0x44] sm:$0xf]
    %v1106 = vld [vmem:[#allocation8 + $0x48] sm:$0xf]
    %v1107 = vld [vmem:[#allocation8 + $0x4c] sm:$0xf]
    %v1108 = vld [vmem:[#allocation8 + $0x50] sm:$0xf]
    %v1109 = vld [vmem:[#allocation8 + $0x54] sm:$0xf]
    %v1110 = vld [vmem:[#allocation8 + $0x58] sm:$0xf]
    %v1111 = vld [vmem:[#allocation8 + $0x5c] sm:$0xf]
    %v1112 = vld [vmem:[#allocation8 + $0x60] sm:$0xf]
    %v1113 = vld [vmem:[#allocation8 + $0x64] sm:$0xf]
    %v1114 = vld [vmem:[#allocation8 + $0x68] sm:$0xf]
    %v1115 = vld [vmem:[#allocation8 + $0x6c] sm:$0xf]
    %v1116 = vld [vmem:[#allocation8 + $0x70] sm:$0xf]
    %v1117 = vld [vmem:[#allocation8 + $0x74] sm:$0xf]
    %v1118 = vld [vmem:[#allocation8 + $0x78] sm:$0xf]
    %v1119 = vld [vmem:[#allocation8 + $0x7c] sm:$0xf]
    %v1120 = vld [vmem:[%s4] sm:$0x1]
    %v1122 = vperm.slane %v1120, 0
    %v1156 = vunpack.c.l.b16 %v1088
    %v1157 = vunpack.c.l.b16 %v1089
    %v1158 = vunpack.c.l.b16 %v1090
    %v1159 = vunpack.c.l.b16 %v1091
    %v1160 = vunpack.c.l.b16 %v1092
    %v1161 = vunpack.c.l.b16 %v1093
    %v1162 = vunpack.c.l.b16 %v1094
    %v1163 = vunpack.c.l.b16 %v1095
    %v1164 = vunpack.c.l.b16 %v1096
    %v1165 = vunpack.c.l.b16 %v1097
    %v1166 = vunpack.c.l.b16 %v1098
    %v1167 = vunpack.c.l.b16 %v1099
    %v1168 = vunpack.c.l.b16 %v1100
    %v1169 = vunpack.c.l.b16 %v1101
    %v1170 = vunpack.c.l.b16 %v1102
    %v1171 = vunpack.c.l.b16 %v1103
    %v1172 = vunpack.c.l.b16 %v1104
    %v1173 = vunpack.c.l.b16 %v1105
    %v1174 = vunpack.c.l.b16 %v1106
    %v1175 = vunpack.c.l.b16 %v1107
    %v1176 = vunpack.c.l.b16 %v1108
    %v1177 = vunpack.c.l.b16 %v1109
    %v1178 = vunpack.c.l.b16 %v1110
    %v1179 = vunpack.c.l.b16 %v1111
    %v1180 = vunpack.c.l.b16 %v1112
    %v1181 = vunpack.c.l.b16 %v1113
    %v1182 = vunpack.c.l.b16 %v1114
    %v1183 = vunpack.c.l.b16 %v1115
    %v1184 = vunpack.c.l.b16 %v1116
    %v1185 = vunpack.c.l.b16 %v1117
    %v1186 = vunpack.c.l.b16 %v1118
    %v1187 = vunpack.c.l.b16 %v1119
    %v1188 = vpack.c.b16 %v1157, %v1156
    %v1189 = vpack.c.b16 %v1159, %v1158
    %v1190 = vpack.c.b16 %v1161, %v1160
    %v1191 = vpack.c.b16 %v1163, %v1162
    %v1192 = vpack.c.b16 %v1165, %v1164
    %v1193 = vpack.c.b16 %v1167, %v1166
    %v1194 = vpack.c.b16 %v1169, %v1168
    %v1195 = vpack.c.b16 %v1171, %v1170
    %v1196 = vpack.c.b16 %v1173, %v1172
    %v1197 = vpack.c.b16 %v1175, %v1174
    %v1198 = vpack.c.b16 %v1177, %v1176
    %v1199 = vpack.c.b16 %v1179, %v1178
    %v1200 = vpack.c.b16 %v1181, %v1180
    %v1201 = vpack.c.b16 %v1183, %v1182
    %v1202 = vpack.c.b16 %v1185, %v1184
    %v1203 = vpack.c.b16 %v1187, %v1186
    %1220 = vmatpush.bf16.msra.mxu0 %v1195
    %1221 = vmatpush.bf16.msra.mxu0 %v1194
    %1222 = vmatpush.bf16.msra.mxu0 %v1193
    %1223 = vmatpush.bf16.msra.mxu0 %v1192
    %1224 = vmatpush.bf16.msra.mxu0 %v1191
    %1225 = vmatpush.bf16.msra.mxu0 %v1190
    %1226 = vmatpush.bf16.msra.mxu0 %v1189
    %1227 = vmatpush.bf16.msra.mxu0 %v1188
    %1228 = vmatmul.bf16.gmra.mxu0 %v1086
    %v1229 = vpop.f32.mrf.mxu0
    %v1230 = vadd.f32 %v1122, %v1229
    %v1231 = vpop.f32.mrf.mxu0
    %1232 = vdwg.mxu0
    %1233 = vmatpush.bf16.msra.mxu0 %v1203
    %1234 = vmatpush.bf16.msra.mxu0 %v1202
    %1235 = vmatpush.bf16.msra.mxu0 %v1201
    %1236 = vmatpush.bf16.msra.mxu0 %v1200
    %1237 = vmatpush.bf16.msra.mxu0 %v1199
    %1238 = vmatpush.bf16.msra.mxu0 %v1198
    %1239 = vmatpush.bf16.msra.mxu0 %v1197
    %1240 = vmatpush.bf16.msra.mxu0 %v1196
    %1241 = vmatmul.bf16.gmra.mxu0 %v1087
    %v1242 = vpop.f32.mrf.mxu0
    %v1243 = vadd.f32 %v1230, %v1242
    %v1244 = vpop.f32.mrf.mxu0
    %1245 = vdwg.mxu0
    %v1246 = vld [vmem:[%s6] sm:$0x1]
    %v1248 = vperm.slane %v1246, 0
    %v1250 = vmul.f32 %v1243, %v1248
    %1251 = vadd.xlane.f32.xlu0 %v1250
    %v1252 = vpop.xlane.xlu0 %1251
    %v1253 = vld [vmem:[%s5] sm:$0x1]
    %v1255 = vperm.slane %v1253, 0
    %v1257 = vmul.f32 %v1243, %v1255
    %1258 = vadd.xlane.f32.xlu0 %v1257
    %v1259 = vpop.xlane.xlu0 %1258
    %v1260 = vmul.f32 %v1259, 0.16666667
    %v1261 = vadd.f32 %v1252, %v1243
    %v1262 = vsub.f32 %v1261, %v1260
    %1263 = vst [vmem:[#allocation10] sm:$0xff] %v1262
    // Predicated region
    $region46: #{tpu_custom_call.1} parent=1 // pred_check
      _
    $region47: #{tpu_custom_call.1} parent=1 // pred_check_branch
      %1265 = sbr.rel (0) target = $region49
    $region48: #{tpu_custom_call.1} parent=1 // pred_region
      %1267 = vsyncadd [#allocation4], 0
      %s1269 = sshll.u32 [#allocation10], 4
      %s1270 = int_to_ptr.vmem [resolvable:$true] %s1269
      %s1271 = sshll.u32 %s7, 4
      %s1272 = int_to_ptr.hbm [resolvable:$true] %s1271
      %1274 = dma.vmem_to_hbm [thread:$0]  %s1270, 128, %s1272, [#allocation4]
    $region49: #{tpu_custom_call.1} parent=1 // pred_fallthru
      _
    // Predicated region
    $region50: #{tpu_custom_call.1} parent=1 // pred_check
      _
    $region51: #{tpu_custom_call.1} parent=1 // pred_check_branch
      %1276 = sbr.rel (0) target = $region53
    $region52: #{tpu_custom_call.1} parent=1 // pred_region
      %1278 = dma.done [#allocation4], 128
    $region53: #{tpu_custom_call.1} parent=1 // pred_fallthru
      _
    %1279 = vsyncpa [#allocation3], 1
    %1280 = vsyncpa [#allocation6], 1
    %1281 = vsyncpa [#allocation9], 1
    %1282 = vsyncpa [#allocation4], 1

</llo_original>
